<compile_context>
chip_gen: v6e
topology: v6e:2x2x1
jax: 0.10.0
libtpu: 0.0.40
codegen_flags: <defaults>
</compile_context>

<pallas_src>
import jax
import jax.numpy as jnp
from jax.experimental import pallas as pl
from jax.experimental.pallas import tpu as pltpu

_OUT_PAD = 128  # lane-dense output staging width


def _round_up(a, m):
    return (a + m - 1) // m * m


def _make_kernel(num_layers, tile_s, inv_hw):
    """Global-avg-pool (streamed) + num_layers ReLU MLP + padded output head."""
    n_chunks = tile_s // 128

    def kernel(*refs):
        x_ref = refs[0]            # (TILE_B, C, TILE_S) block of the activation
        out_ref = refs[-2]         # (TILE_B, _OUT_PAD)
        partial = refs[-1]         # (TILE_B, C, 128) f32 scratch (VMEM)
        param_refs = refs[1:-2]    # w0, b0, ..., w_out_pad, b_out_pad (resident)

        s = pl.program_id(1)

        @pl.when(s == 0)
        def _():
            partial[...] = jnp.zeros_like(partial)

        # Streaming partial sum: fold 128-lane chunks with VPU adds; the single
        # 128-wide cross-lane reduce happens only once, at the last step.
        acc = partial[...]
        for k in range(n_chunks):
            acc = acc + x_ref[:, :, pl.ds(k * 128, 128)].astype(jnp.float32)
        partial[...] = acc

        @pl.when(s == pl.num_programs(1) - 1)
        def _():
            # multiply by precomputed 1/(H*W) instead of dividing
            pooled = jnp.sum(partial[...], axis=-1) * inv_hw   # (TILE_B, C)
            h = pooled
            for i in range(num_layers):
                w = param_refs[2 * i][...].astype(jnp.float32)       # (in, hidden)
                b = param_refs[2 * i + 1][...].astype(jnp.float32)   # (1, hidden)
                h = jnp.maximum(
                    jnp.dot(h, w, preferred_element_type=jnp.float32) + b, 0.0
                )
            wo = param_refs[-2][...].astype(jnp.float32)             # (hidden, 128) zero-padded
            bo = param_refs[-1][...].astype(jnp.float32)             # (1, 128) zero-padded
            out = jnp.dot(h, wo, preferred_element_type=jnp.float32) + bo
            out_ref[...] = out.astype(out_ref.dtype)                 # lane-dense store

    return kernel


def lightweight_network_forward(x_nchw, params, num_layers):
    """x_nchw: (B, C, H, W). params: flat list [w0, b0, ..., w_out, b_out]."""
    B, C, H, W = x_nchw.shape
    HW = H * W
    x = x_nchw.reshape(B, C, HW)

    # ---- tile selection (sized for the smallest-VMEM generation, v7x) ----
    if HW <= 512:
        hw_pad = _round_up(HW, 128)
        tile_s = hw_pad
    else:
        tile_s = 512                      # 512-lane tiles ~= 85% of HBM roofline
        hw_pad = _round_up(HW, tile_s)

    itemsize = jnp.dtype(x.dtype).itemsize
    per_row = C * tile_s * itemsize       # bytes one batch row contributes per block
    budget = 8 * 1024 * 1024              # per input buffer (x2 double-buffer ~= 16 MiB)
    tile_b = max(8, min(256, (budget // per_row) // 8 * 8))
    tile_b = min(tile_b, _round_up(B, 8))
    b_pad = _round_up(B, tile_b)

    # Zero-pad batch/spatial: padded zeros do not perturb the pooled sum, and the
    # divisor stays the true H*W (ragged-tile correctness concern handled here).
    x = jnp.pad(x, ((0, b_pad - B), (0, 0), (0, hw_pad - HW)))
    # NOTE: for production, pass a bf16 activation to halve HBM bytes moved; the
    # kernel accumulates in f32 either way.  Kept f32 here to match the f32 ref.

    # Zero-pad the output head to 128 lanes so the final store is unmasked.
    wo, bo = params[-2], params[-1]
    out_dim = wo.shape[1]
    params_p = list(params[:-2])
    params_p.append(jnp.pad(wo, ((0, 0), (0, _OUT_PAD - out_dim))))
    params_p.append(jnp.pad(bo, ((0, 0), (0, _OUT_PAD - out_dim))))

    kernel = _make_kernel(num_layers, tile_s, 1.0 / float(HW))

    grid = (b_pad // tile_b, hw_pad // tile_s)
    in_specs = [pl.BlockSpec((tile_b, C, tile_s), lambda b, s: (b, 0, s))]
    for p in params_p:
        # constant block index -> DMA'd once, resident across all grid steps
        in_specs.append(pl.BlockSpec(p.shape, lambda b, s: (0, 0)))

    out = pl.pallas_call(
        kernel,
        out_shape=jax.ShapeDtypeStruct((b_pad, _OUT_PAD), x_nchw.dtype),
        grid_spec=pltpu.PrefetchScalarGridSpec(
            num_scalar_prefetch=0,
            grid=grid,
            in_specs=in_specs,
            out_specs=pl.BlockSpec((tile_b, _OUT_PAD), lambda b, s: (b, 0)),
            scratch_shapes=[pltpu.VMEM((tile_b, C, 128), jnp.float32)],
        ),
        compiler_params=pltpu.CompilerParams(
            dimension_semantics=("parallel", "arbitrary"),
            vmem_limit_bytes=32 * 1024 * 1024,
        ),
    )(x, *params_p)
    return out[:B, :out_dim]


def init_params(key, input_channels, hidden_dim, num_layers):
    """Deterministic PyTorch-style (uniform +-1/sqrt(fan_in)) Linear init."""
    params = []
    dims = [input_channels] + [hidden_dim] * num_layers
    for i in range(num_layers):
        fan_in = dims[i]
        key, k_w, k_b = jax.random.split(key, 3)
        bound = 1.0 / jnp.sqrt(fan_in)
        w = jax.random.uniform(k_w, (dims[i], dims[i + 1]), jnp.float32, -bound, bound)
        b = jax.random.uniform(k_b, (1, dims[i + 1]), jnp.float32, -bound, bound)
        params += [w, b]
    key, k_w, k_b = jax.random.split(key, 3)
    bound = 1.0 / jnp.sqrt(hidden_dim)
    w_out = jax.random.uniform(k_w, (hidden_dim, 2), jnp.float32, -bound, bound)
    b_out = jax.random.uniform(k_b, (1, 2), jnp.float32, -bound, bound)
    params += [w_out, b_out]
    return params


def reference_forward(x_nchw, params, num_layers):
    """Pure-JAX reference matching the PyTorch forward."""
    B = x_nchw.shape[0]
    h = jnp.mean(x_nchw, axis=(2, 3)).reshape(B, -1)
    for i in range(num_layers):
        w, b = params[2 * i], params[2 * i + 1]
        h = jnp.maximum(h @ w + b, 0.0)
    return h @ params[-2] + params[-1]


if __name__ == "__main__":
    input_channels = 4
    hidden_dim = 32
    num_layers = 2
    B, H, W = 2, 16, 16

    key = jax.random.PRNGKey(0)
    key, k_x = jax.random.split(key)
    x = jax.random.normal(k_x, (B, input_channels, H, W), jnp.float32)
    params = init_params(key, input_channels, hidden_dim, num_layers)

    out = lightweight_network_forward(x, params, num_layers)
    out = jax.block_until_ready(out)

    ref = reference_forward(x, params, num_layers)
    assert out.shape == (B, 2), out.shape
    assert jnp.allclose(out, ref, atol=1e-5, rtol=1e-5), (out, ref)
    print("KERNEL_OK")
</pallas_src>

<mosaic_0001>
module attributes {stable_mosaic.version = 11 : i64} {
  func.func @kernel(%arg0: i32, %arg1: i32, %arg2: memref<8x4x256xf32, #tpu.memory_space<vmem>>, %arg3: memref<4x32xf32, #tpu.memory_space<vmem>>, %arg4: memref<1x32xf32, #tpu.memory_space<vmem>>, %arg5: memref<32x32xf32, #tpu.memory_space<vmem>>, %arg6: memref<1x32xf32, #tpu.memory_space<vmem>>, %arg7: memref<32x128xf32, #tpu.memory_space<vmem>>, %arg8: memref<1x128xf32, #tpu.memory_space<vmem>>, %arg9: memref<8x128xf32, #tpu.memory_space<vmem>>, %arg10: memref<8x4x128xf32, #tpu.memory_space<vmem>>) attributes {dimension_semantics = [#tpu.dimension_semantics<parallel>, #tpu.dimension_semantics<arbitrary>], iteration_bounds = array<i64: 1, 1>, scalar_prefetch = 0 : i64, scratch_operands = 1 : i64, tpu.core_type = #tpu.core_type<tc>, window_params = [{transform_indices = @transform_0, window_bounds = array<i64: 8, 4, 256>}, {pipeline_mode = #tpu.pipeline_mode<synchronous>, transform_indices = @transform_1, window_bounds = array<i64: 4, 32>}, {pipeline_mode = #tpu.pipeline_mode<synchronous>, transform_indices = @transform_2, window_bounds = array<i64: 1, 32>}, {pipeline_mode = #tpu.pipeline_mode<synchronous>, transform_indices = @transform_3, window_bounds = array<i64: 32, 32>}, {pipeline_mode = #tpu.pipeline_mode<synchronous>, transform_indices = @transform_4, window_bounds = array<i64: 1, 32>}, {pipeline_mode = #tpu.pipeline_mode<synchronous>, transform_indices = @transform_5, window_bounds = array<i64: 32, 128>}, {pipeline_mode = #tpu.pipeline_mode<synchronous>, transform_indices = @transform_6, window_bounds = array<i64: 1, 128>}, {transform_indices = @transform_7, window_bounds = array<i64: 8, 128>}]} {
    %c0_i32 = arith.constant 0 : i32
    %0 = arith.cmpi eq, %arg1, %c0_i32 : i32
    %1 = arith.extui %0 : i1 to i32
    %c0_i32_0 = arith.constant 0 : i32
    %2 = arith.cmpi ne, %1, %c0_i32_0 : i32
    scf.if %2 {
      %cst = arith.constant 0.000000e+00 : f32
      %12 = vector.broadcast %cst : f32 to vector<8x4x128xf32>
      %c0_13 = arith.constant 0 : index
      %c0_14 = arith.constant 0 : index
      %c0_15 = arith.constant 0 : index
      %13 = vector.load %arg10[%c0_13, %c0_14, %c0_15] : memref<8x4x128xf32, #tpu.memory_space<vmem>>, vector<8x4x128xf32>
      tpu.vector_store %arg10[%c0_13, %c0_14, %c0_15], %12 {strides = array<i32>} : memref<8x4x128xf32, #tpu.memory_space<vmem>>, vector<8x4x128xf32>,
    } else {
    }
    %c0 = arith.constant 0 : index
    %c0_1 = arith.constant 0 : index
    %c0_2 = arith.constant 0 : index
    %3 = vector.load %arg10[%c0, %c0_1, %c0_2] : memref<8x4x128xf32, #tpu.memory_space<vmem>>, vector<8x4x128xf32>
    %c0_3 = arith.constant 0 : index
    %c0_4 = arith.constant 0 : index
    %c0_5 = arith.constant 0 : index
    %4 = vector.load %arg2[%c0_3, %c0_4, %c0_5] : memref<8x4x256xf32, #tpu.memory_space<vmem>>, vector<8x4x128xf32>
    %5 = arith.addf %3, %4 : vector<8x4x128xf32>
    %c0_6 = arith.constant 0 : index
    %c0_7 = arith.constant 0 : index
    %c128 = arith.constant 128 : index
    %6 = vector.load %arg2[%c0_6, %c0_7, %c128] : memref<8x4x256xf32, #tpu.memory_space<vmem>>, vector<8x4x128xf32>
    %7 = arith.addf %5, %6 : vector<8x4x128xf32>
    %c0_8 = arith.constant 0 : index
    %c0_9 = arith.constant 0 : index
    %c0_10 = arith.constant 0 : index
    %8 = vector.load %arg10[%c0_8, %c0_9, %c0_10] : memref<8x4x128xf32, #tpu.memory_space<vmem>>, vector<8x4x128xf32>
    tpu.vector_store %arg10[%c0_8, %c0_9, %c0_10], %7 {strides = array<i32>} : memref<8x4x128xf32, #tpu.memory_space<vmem>>, vector<8x4x128xf32>,
    %c0_i32_11 = arith.constant 0 : i32
    %9 = arith.cmpi eq, %arg1, %c0_i32_11 : i32
    %10 = arith.extui %9 : i1 to i32
    %c0_i32_12 = arith.constant 0 : i32
    %11 = arith.cmpi ne, %10, %c0_i32_12 : i32
    scf.if %11 {
      %c0_13 = arith.constant 0 : index
      %c0_14 = arith.constant 0 : index
      %c0_15 = arith.constant 0 : index
      %12 = vector.load %arg10[%c0_13, %c0_14, %c0_15] : memref<8x4x128xf32, #tpu.memory_space<vmem>>, vector<8x4x128xf32>
      %cst = arith.constant dense<0.000000e+00> : vector<8x4xf32>
      %13 = vector.multi_reduction <add>, %12, %cst [2] : vector<8x4x128xf32> to vector<8x4xf32>
      %cst_16 = arith.constant 3.906250e-03 : f32
      %14 = vector.broadcast %cst_16 : f32 to vector<8x4xf32>
      %15 = arith.mulf %13, %14 : vector<8x4xf32>
      %c0_17 = arith.constant 0 : index
      %c0_18 = arith.constant 0 : index
      %16 = vector.load %arg3[%c0_17, %c0_18] : memref<4x32xf32, #tpu.memory_space<vmem>>, vector<4x32xf32>
      %c0_19 = arith.constant 0 : index
      %c0_20 = arith.constant 0 : index
      %17 = vector.load %arg4[%c0_19, %c0_20] : memref<1x32xf32, #tpu.memory_space<vmem>>, vector<1x32xf32>
      %cst_21 = arith.constant dense<0.000000e+00> : vector<8x32xf32>
      %18 = tpu.matmul %15, %16, %cst_21 {dimension_numbers = #tpu.dot_dimension_numbers<[1], [0], [0], [1], [0, 0, 1, 1], [], []>} : vector<8x4xf32>, vector<4x32xf32>, vector<8x32xf32> -> vector<8x32xf32>
      %19 = vector.broadcast %17 : vector<1x32xf32> to vector<8x32xf32>
      %20 = arith.addf %18, %19 : vector<8x32xf32>
      %cst_22 = arith.constant 0.000000e+00 : f32
      %21 = vector.broadcast %cst_22 : f32 to vector<8x32xf32>
      %22 = arith.maximumf %20, %21 : vector<8x32xf32>
      %c0_23 = arith.constant 0 : index
      %c0_24 = arith.constant 0 : index
      %23 = vector.load %arg5[%c0_23, %c0_24] : memref<32x32xf32, #tpu.memory_space<vmem>>, vector<32x32xf32>
      %c0_25 = arith.constant 0 : index
      %c0_26 = arith.constant 0 : index
      %24 = vector.load %arg6[%c0_25, %c0_26] : memref<1x32xf32, #tpu.memory_space<vmem>>, vector<1x32xf32>
      %cst_27 = arith.constant dense<0.000000e+00> : vector<8x32xf32>
      %25 = tpu.matmul %22, %23, %cst_27 {dimension_numbers = #tpu.dot_dimension_numbers<[1], [0], [0], [1], [0, 0, 1, 1], [], []>} : vector<8x32xf32>, vector<32x32xf32>, vector<8x32xf32> -> vector<8x32xf32>
      %26 = vector.broadcast %24 : vector<1x32xf32> to vector<8x32xf32>
      %27 = arith.addf %25, %26 : vector<8x32xf32>
      %cst_28 = arith.constant 0.000000e+00 : f32
      %28 = vector.broadcast %cst_28 : f32 to vector<8x32xf32>
      %29 = arith.maximumf %27, %28 : vector<8x32xf32>
      %c0_29 = arith.constant 0 : index
      %c0_30 = arith.constant 0 : index
      %30 = vector.load %arg7[%c0_29, %c0_30] : memref<32x128xf32, #tpu.memory_space<vmem>>, vector<32x128xf32>
      %c0_31 = arith.constant 0 : index
      %c0_32 = arith.constant 0 : index
      %31 = vector.load %arg8[%c0_31, %c0_32] : memref<1x128xf32, #tpu.memory_space<vmem>>, vector<1x128xf32>
      %cst_33 = arith.constant dense<0.000000e+00> : vector<8x128xf32>
      %32 = tpu.matmul %29, %30, %cst_33 {dimension_numbers = #tpu.dot_dimension_numbers<[1], [0], [0], [1], [0, 0, 1, 1], [], []>} : vector<8x32xf32>, vector<32x128xf32>, vector<8x128xf32> -> vector<8x128xf32>
      %33 = vector.broadcast %31 : vector<1x128xf32> to vector<8x128xf32>
      %34 = arith.addf %32, %33 : vector<8x128xf32>
      %c0_34 = arith.constant 0 : index
      %c0_35 = arith.constant 0 : index
      %35 = vector.load %arg9[%c0_34, %c0_35] : memref<8x128xf32, #tpu.memory_space<vmem>>, vector<8x128xf32>
      tpu.vector_store %arg9[%c0_34, %c0_35], %34 {strides = array<i32>} : memref<8x128xf32, #tpu.memory_space<vmem>>, vector<8x128xf32>,
    } else {
    }
    return
  }
  func.func @transform_0(%arg0: i32, %arg1: i32) -> (i32, i32, i32) {
    %c0_i32 = arith.constant 0 : i32
    %c0_i32_0 = arith.constant 0 : i32
    return %arg0, %c0_i32, %arg1 : i32, i32, i32
  }
  func.func @transform_1(%arg0: i32, %arg1: i32) -> (i32, i32) {
    %c0_i32 = arith.constant 0 : i32
    %c0_i32_0 = arith.constant 0 : i32
    %c0_i32_1 = arith.constant 0 : i32
    return %c0_i32, %c0_i32_0 : i32, i32
  }
  func.func @transform_2(%arg0: i32, %arg1: i32) -> (i32, i32) {
    %c0_i32 = arith.constant 0 : i32
    %c0_i32_0 = arith.constant 0 : i32
    %c0_i32_1 = arith.constant 0 : i32
    return %c0_i32, %c0_i32_0 : i32, i32
  }
  func.func @transform_3(%arg0: i32, %arg1: i32) -> (i32, i32) {
    %c0_i32 = arith.constant 0 : i32
    %c0_i32_0 = arith.constant 0 : i32
    %c0_i32_1 = arith.constant 0 : i32
    return %c0_i32, %c0_i32_0 : i32, i32
  }
  func.func @transform_4(%arg0: i32, %arg1: i32) -> (i32, i32) {
    %c0_i32 = arith.constant 0 : i32
    %c0_i32_0 = arith.constant 0 : i32
    %c0_i32_1 = arith.constant 0 : i32
    return %c0_i32, %c0_i32_0 : i32, i32
  }
  func.func @transform_5(%arg0: i32, %arg1: i32) -> (i32, i32) {
    %c0_i32 = arith.constant 0 : i32
    %c0_i32_0 = arith.constant 0 : i32
    %c0_i32_1 = arith.constant 0 : i32
    return %c0_i32, %c0_i32_0 : i32, i32
  }
  func.func @transform_6(%arg0: i32, %arg1: i32) -> (i32, i32) {
    %c0_i32 = arith.constant 0 : i32
    %c0_i32_0 = arith.constant 0 : i32
    %c0_i32_1 = arith.constant 0 : i32
    return %c0_i32, %c0_i32_0 : i32, i32
  }
  func.func @transform_7(%arg0: i32, %arg1: i32) -> (i32, i32) {
    %c0_i32 = arith.constant 0 : i32
    %c0_i32_0 = arith.constant 0 : i32
    return %arg0, %c0_i32 : i32, i32
  }
}

</mosaic_0001>

<llo_original>
// kernel: tpu_custom_call.1
$region0: #{tpu_custom_call.1}
  #allocation0 [shape = 'u32[]', space=smem, size = 0x4, offset = 0x4, fixed_abs, tag = 'smem constant byte address 0x4 - core index']
  #allocation1 [shape = 'u32[144,128]{1,0:T(1,128)}', space=vmem, size = 0x12000, scoped, tag = 'internal scratch']
  #allocation2 [shape = 'f32[8,4,128]{2,1,0:T(4,128)}', space=vmem, size = 0x4000, scoped, tag = 'scratch operand']
  %s0 = inlined_call_operand.hbm [shape: f32[8,4,256], index: 0, kind: input, shape index: {}]
  %s1 = inlined_call_operand.hbm [shape: f32[4,32], index: 1, kind: input, shape index: {}]
  %s2 = inlined_call_operand.vmem [shape: f32[1,32], index: 2, kind: input, shape index: {}]
  %s3 = inlined_call_operand.hbm [shape: f32[32,32], index: 3, kind: input, shape index: {}]
  %s4 = inlined_call_operand.vmem [shape: f32[1,32], index: 4, kind: input, shape index: {}]
  %s5 = inlined_call_operand.hbm [shape: f32[32,128], index: 5, kind: input, shape index: {}]
  %s6 = inlined_call_operand.vmem [shape: f32[1,128], index: 6, kind: input, shape index: {}]
  %s7 = inlined_call_operand.hbm [shape: f32[8,128], index: 7, kind: output, shape index: {}]
  %s8 = sld [smem:[#allocation0]]
  $region62: #{tpu_custom_call.1} parent=0
    _
  %s10 = ssub.s32 1, %s8
  %s11 = scalar_select 0, %s10, %s8
  $region1: #{tpu_custom_call.1} parent=0
    #allocation3 [shape = 'u8[32768]{0}', space=vmem, size = 0x8000, scoped, tag = 'input window, operand 0, single buffered']
    #allocation4 [shape = 's32[1]{0}', space=sflag, size = 0x4, scoped, tag = 'scoped memory for tpu_custom_call.1']
    #allocation5 [shape = 's32[1]{0}', space=sflag, size = 0x4, scoped, tag = 'scoped memory for tpu_custom_call.1']
    #allocation6 [shape = 'u8[2048]{0}', space=vmem, size = 0x800, scoped, tag = 'input window, operand 1, single buffered']
    #allocation7 [shape = 's32[1]{0}', space=sflag, size = 0x4, scoped, tag = 'scoped memory for tpu_custom_call.1']
    #allocation8 [shape = 'u8[16384]{0}', space=vmem, size = 0x4000, scoped, tag = 'input window, operand 3, single buffered']
    #allocation9 [shape = 'u8[16384]{0}', space=vmem, size = 0x4000, scoped, tag = 'input window, operand 5, single buffered']
    #allocation10 [shape = 's32[1]{0}', space=sflag, size = 0x4, scoped, tag = 'scoped memory for tpu_custom_call.1']
    #allocation11 [shape = 'u8[4096]{0}', space=vmem, size = 0x1000, scoped, tag = 'output window, operand 0, single buffered']
    %12 = vsyncpa [#allocation4], 0
    %13 = vsyncpa [#allocation7], 0
    %14 = vsyncpa [#allocation10], 0
    %15 = vsyncpa [#allocation5], 0
    // Predicated region
    $region2: #{tpu_custom_call.1} parent=1 // pred_check
      _
    $region3: #{tpu_custom_call.1} parent=1 // pred_check_branch
      %17 = sbr.rel (0) target = $region5
    $region4: #{tpu_custom_call.1} parent=1 // pred_region
      %s19 = ssub.s32 1024, 1024
      %20 = vsyncadd [#allocation4], %s19
      %s21 = sshll.u32 [#allocation3], 4
      %s22 = int_to_ptr.vmem [resolvable:$true] %s21
      %27 = dma.hbm_to_vmem [thread:$0]  %s0, 1024, %s22, [#allocation4], 128, 128, 8
    $region5: #{tpu_custom_call.1} parent=1 // pred_fallthru
      _
    // Predicated region
    $region6: #{tpu_custom_call.1} parent=1 // pred_check
      _
    $region7: #{tpu_custom_call.1} parent=1 // pred_check_branch
      %29 = sbr.rel (0) target = $region9
    $region8: #{tpu_custom_call.1} parent=1 // pred_region
      %s31 = ssub.s32 64, 64
      %32 = vsyncadd [#allocation7], %s31
      %s34 = sshll.u32 [#allocation6], 4
      %s35 = int_to_ptr.vmem [resolvable:$true] %s34
      %37 = dma.hbm_to_vmem [thread:$0]  %s1, 64, %s35, [#allocation7]
    $region9: #{tpu_custom_call.1} parent=1 // pred_fallthru
      _
    // Predicated region
    $region10: #{tpu_custom_call.1} parent=1 // pred_check
      _
    $region11: #{tpu_custom_call.1} parent=1 // pred_check_branch
      %39 = sbr.rel (0) target = $region13
    $region12: #{tpu_custom_call.1} parent=1 // pred_region
      _
    $region13: #{tpu_custom_call.1} parent=1 // pred_fallthru
      _
    // Predicated region
    $region14: #{tpu_custom_call.1} parent=1 // pred_check
      _
    $region15: #{tpu_custom_call.1} parent=1 // pred_check_branch
      %41 = sbr.rel (0) target = $region17
    $region16: #{tpu_custom_call.1} parent=1 // pred_region
      %s43 = ssub.s32 512, 512
      %44 = vsyncadd [#allocation7], %s43
      %s45 = sshll.u32 [#allocation8], 4
      %s46 = int_to_ptr.vmem [resolvable:$true] %s45
      %51 = dma.hbm_to_vmem [thread:$0]  %s3, 512, %s46, [#allocation7], 128, 128, 8
    $region17: #{tpu_custom_call.1} parent=1 // pred_fallthru
      _
    // Predicated region
    $region18: #{tpu_custom_call.1} parent=1 // pred_check
      _
    $region19: #{tpu_custom_call.1} parent=1 // pred_check_branch
      %53 = sbr.rel (0) target = $region21
    $region20: #{tpu_custom_call.1} parent=1 // pred_region
      _
    $region21: #{tpu_custom_call.1} parent=1 // pred_fallthru
      _
    // Predicated region
    $region22: #{tpu_custom_call.1} parent=1 // pred_check
      _
    $region23: #{tpu_custom_call.1} parent=1 // pred_check_branch
      %55 = sbr.rel (0) target = $region25
    $region24: #{tpu_custom_call.1} parent=1 // pred_region
      %s57 = ssub.s32 512, 512
      %58 = vsyncadd [#allocation10], %s57
      %s59 = sshll.u32 [#allocation9], 4
      %s60 = int_to_ptr.vmem [resolvable:$true] %s59
      %65 = dma.hbm_to_vmem [thread:$0]  %s5, 512, %s60, [#allocation10], 128, 128, 8
    $region25: #{tpu_custom_call.1} parent=1 // pred_fallthru
      _
    // Predicated region
    $region26: #{tpu_custom_call.1} parent=1 // pred_check
      _
    $region27: #{tpu_custom_call.1} parent=1 // pred_check_branch
      %67 = sbr.rel (0) target = $region29
    $region28: #{tpu_custom_call.1} parent=1 // pred_region
      _
    $region29: #{tpu_custom_call.1} parent=1 // pred_fallthru
      _
    // Predicated region
    $region30: #{tpu_custom_call.1} parent=1 // pred_check
      _
    $region31: #{tpu_custom_call.1} parent=1 // pred_check_branch
      %69 = sbr.rel (0) target = $region33
    $region32: #{tpu_custom_call.1} parent=1 // pred_region
      %70 = dma.done [#allocation4], 1024
    $region33: #{tpu_custom_call.1} parent=1 // pred_fallthru
      _
    // Predicated region
    $region34: #{tpu_custom_call.1} parent=1 // pred_check
      _
    $region35: #{tpu_custom_call.1} parent=1 // pred_check_branch
      %72 = sbr.rel (0) target = $region37
    $region36: #{tpu_custom_call.1} parent=1 // pred_region
      %73 = dma.done [#allocation7], 64
    $region37: #{tpu_custom_call.1} parent=1 // pred_fallthru
      _
    // Predicated region
    $region38: #{tpu_custom_call.1} parent=1 // pred_check
      _
    $region39: #{tpu_custom_call.1} parent=1 // pred_check_branch
      %75 = sbr.rel (0) target = $region41
    $region40: #{tpu_custom_call.1} parent=1 // pred_region
      %76 = dma.done [#allocation7], 512
    $region41: #{tpu_custom_call.1} parent=1 // pred_fallthru
      _
    // Predicated region
    $region42: #{tpu_custom_call.1} parent=1 // pred_check
      _
    $region43: #{tpu_custom_call.1} parent=1 // pred_check_branch
      %78 = sbr.rel (0) target = $region45
    $region44: #{tpu_custom_call.1} parent=1 // pred_region
      %79 = dma.done [#allocation10], 512
    $region45: #{tpu_custom_call.1} parent=1 // pred_fallthru
      _
    %p80 = scmp.eq.s32.totalorder 0, 0
    // Predicated region
    $region46: #{tpu_custom_call.1} parent=1 // pred_check
      %p81 = pneg %p80
    $region47: #{tpu_custom_call.1} parent=1 // pred_check_branch
      %83 = sbr.rel (%p81) target = $region49
    $region48: #{tpu_custom_call.1} parent=1 // pred_region
      %84 = vst [vmem:[#allocation2] sm:$0xf] 0.0
      %85 = vst [vmem:[#allocation2 + $0x4] sm:$0xf] 0.0
      %86 = vst [vmem:[#allocation2 + $0x8] sm:$0xf] 0.0
      %87 = vst [vmem:[#allocation2 + $0xc] sm:$0xf] 0.0
      %88 = vst [vmem:[#allocation2 + $0x10] sm:$0xf] 0.0
      %89 = vst [vmem:[#allocation2 + $0x14] sm:$0xf] 0.0
      %90 = vst [vmem:[#allocation2 + $0x18] sm:$0xf] 0.0
      %91 = vst [vmem:[#allocation2 + $0x1c] sm:$0xf] 0.0
    $region49: #{tpu_custom_call.1} parent=1 // pred_fallthru
      _
    %v92 = vld [vmem:[#allocation2] sm:$0xf]
    %v93 = vld [vmem:[#allocation2 + $0x4] sm:$0xf]
    %v94 = vld [vmem:[#allocation2 + $0x8] sm:$0xf]
    %v95 = vld [vmem:[#allocation2 + $0xc] sm:$0xf]
    %v96 = vld [vmem:[#allocation2 + $0x10] sm:$0xf]
    %v97 = vld [vmem:[#allocation2 + $0x14] sm:$0xf]
    %v98 = vld [vmem:[#allocation2 + $0x18] sm:$0xf]
    %v99 = vld [vmem:[#allocation2 + $0x1c] sm:$0xf]
    %v100 = vld [vmem:[#allocation3] sm:$0xf]
    %v101 = vld [vmem:[#allocation3 + $0x8] sm:$0xf]
    %v102 = vld [vmem:[#allocation3 + $0x10] sm:$0xf]
    %v103 = vld [vmem:[#allocation3 + $0x18] sm:$0xf]
    %v104 = vld [vmem:[#allocation3 + $0x20] sm:$0xf]
    %v105 = vld [vmem:[#allocation3 + $0x28] sm:$0xf]
    %v106 = vld [vmem:[#allocation3 + $0x30] sm:$0xf]
    %v107 = vld [vmem:[#allocation3 + $0x38] sm:$0xf]
    %v108 = vadd.f32 %v92, %v100
    %v109 = vadd.f32 %v93, %v101
    %v110 = vadd.f32 %v94, %v102
    %v111 = vadd.f32 %v95, %v103
    %v112 = vadd.f32 %v96, %v104
    %v113 = vadd.f32 %v97, %v105
    %v114 = vadd.f32 %v98, %v106
    %v115 = vadd.f32 %v99, %v107
    %v116 = vld [vmem:[#allocation3 + $0x4] sm:$0xf]
    %v117 = vld [vmem:[#allocation3 + $0xc] sm:$0xf]
    %v118 = vld [vmem:[#allocation3 + $0x14] sm:$0xf]
    %v119 = vld [vmem:[#allocation3 + $0x1c] sm:$0xf]
    %v120 = vld [vmem:[#allocation3 + $0x24] sm:$0xf]
    %v121 = vld [vmem:[#allocation3 + $0x2c] sm:$0xf]
    %v122 = vld [vmem:[#allocation3 + $0x34] sm:$0xf]
    %v123 = vld [vmem:[#allocation3 + $0x3c] sm:$0xf]
    %v124 = vadd.f32 %v108, %v116
    %v125 = vadd.f32 %v109, %v117
    %v126 = vadd.f32 %v110, %v118
    %v127 = vadd.f32 %v111, %v119
    %v128 = vadd.f32 %v112, %v120
    %v129 = vadd.f32 %v113, %v121
    %v130 = vadd.f32 %v114, %v122
    %v131 = vadd.f32 %v115, %v123
    %132 = vst [vmem:[#allocation2] sm:$0xf] %v124
    %133 = vst [vmem:[#allocation2 + $0x4] sm:$0xf] %v125
    %134 = vst [vmem:[#allocation2 + $0x8] sm:$0xf] %v126
    %135 = vst [vmem:[#allocation2 + $0xc] sm:$0xf] %v127
    %136 = vst [vmem:[#allocation2 + $0x10] sm:$0xf] %v128
    %137 = vst [vmem:[#allocation2 + $0x14] sm:$0xf] %v129
    %138 = vst [vmem:[#allocation2 + $0x18] sm:$0xf] %v130
    %139 = vst [vmem:[#allocation2 + $0x1c] sm:$0xf] %v131
    // Predicated region
    $region50: #{tpu_custom_call.1} parent=1 // pred_check
      %p140 = pneg %p80
    $region51: #{tpu_custom_call.1} parent=1 // pred_check_branch
      %142 = sbr.rel (%p140) target = $region53
    $region52: #{tpu_custom_call.1} parent=1 // pred_region
      %v143 = vld [vmem:[#allocation2] sm:$0xf]
      %v144 = vld [vmem:[#allocation2 + $0x4] sm:$0xf]
      %v145 = vld [vmem:[#allocation2 + $0x8] sm:$0xf]
      %v146 = vld [vmem:[#allocation2 + $0xc] sm:$0xf]
      %v147 = vld [vmem:[#allocation2 + $0x10] sm:$0xf]
      %v148 = vld [vmem:[#allocation2 + $0x14] sm:$0xf]
      %v149 = vld [vmem:[#allocation2 + $0x18] sm:$0xf]
      %v150 = vld [vmem:[#allocation2 + $0x1c] sm:$0xf]
      %vm151 = vcmask 1043456
      %v152 = vsel %vm151, %v143, 0.0
      %153 = vadd.xlane.f32.xlu0 %v152
      %v154 = vpop.xlane.xlu0 %153
      %v155 = vsel %vm151, %v144, 0.0
      %156 = vadd.xlane.f32.xlu0 %v155
      %v157 = vpop.xlane.xlu0 %156
      %v158 = vsel %vm151, %v145, 0.0
      %159 = vadd.xlane.f32.xlu0 %v158
      %v160 = vpop.xlane.xlu0 %159
      %v161 = vsel %vm151, %v146, 0.0
      %162 = vadd.xlane.f32.xlu0 %v161
      %v163 = vpop.xlane.xlu0 %162
      %v164 = vsel %vm151, %v147, 0.0
      %165 = vadd.xlane.f32.xlu0 %v164
      %v166 = vpop.xlane.xlu0 %165
      %v167 = vsel %vm151, %v148, 0.0
      %168 = vadd.xlane.f32.xlu0 %v167
      %v169 = vpop.xlane.xlu0 %168
      %v170 = vsel %vm151, %v149, 0.0
      %171 = vadd.xlane.f32.xlu0 %v170
      %v172 = vpop.xlane.xlu0 %171
      %v173 = vsel %vm151, %v150, 0.0
      %174 = vadd.xlane.f32.xlu0 %v173
      %v175 = vpop.xlane.xlu0 %174
      %v176 = vmul.f32 %v154, 0.00390625
      %v177 = vmul.f32 %v157, 0.00390625
      %v178 = vmul.f32 %v160, 0.00390625
      %v179 = vmul.f32 %v163, 0.00390625
      %v180 = vmul.f32 %v166, 0.00390625
      %v181 = vmul.f32 %v169, 0.00390625
      %v182 = vmul.f32 %v172, 0.00390625
      %v183 = vmul.f32 %v175, 0.00390625
      %v184 = vld [vmem:[#allocation6] sm:$0xf]
      %v185 = vld [vmem:[%s2] sm:$0x1]
      %v187 = vlaneseq
      %v188 = vshrl.u32 %v187, 7
      %v189 = vsub.s32 0, %v188
      %v190 = vrot.slane %v185, %v189
      %v200 = vlaneseq
      %v201 = vand.u32 %v200, 127
      %v202 = vlaneseq
      %v203 = vshrl.u32 %v202, 7
      %v204 = vsub.s32 %v201, %v203
      %v205 = vrot.slane %v176, %v204
      %v206 = vlaneseq
      %v207 = vshrl.u32 %v206, 7
      %v208 = vsub.s32 %v201, %v207
      %v209 = vrot.slane %v177, %v208
      %v210 = vlaneseq
      %v211 = vshrl.u32 %v210, 7
      %v212 = vsub.s32 %v201, %v211
      %v213 = vrot.slane %v178, %v212
      %v214 = vlaneseq
      %v215 = vshrl.u32 %v214, 7
      %v216 = vsub.s32 %v201, %v215
      %v217 = vrot.slane %v179, %v216
      %v218 = vlaneseq
      %v219 = vshrl.u32 %v218, 7
      %v220 = vsub.s32 %v201, %v219
      %v221 = vrot.slane %v180, %v220
      %v222 = vlaneseq
      %v223 = vshrl.u32 %v222, 7
      %v224 = vsub.s32 %v201, %v223
      %v225 = vrot.slane %v181, %v224
      %v226 = vlaneseq
      %v227 = vshrl.u32 %v226, 7
      %v228 = vsub.s32 %v201, %v227
      %v229 = vrot.slane %v182, %v228
      %v230 = vlaneseq
      %v231 = vshrl.u32 %v230, 7
      %v232 = vsub.s32 %v201, %v231
      %v233 = vrot.slane %v183, %v232
      %vm234 = vcmask 1041409
      %v235 = vsel %vm234, %v209, %v205
      %vm236 = vcmask 1042434
      %v237 = vsel %vm236, %v213, %v235
      %vm238 = vcmask 1043459
      %v239 = vsel %vm238, %v217, %v237
      %vm240 = vcmask 1044484
      %v241 = vsel %vm240, %v221, %v239
      %vm242 = vcmask 1045509
      %v243 = vsel %vm242, %v225, %v241
      %vm244 = vcmask 1046534
      %v245 = vsel %vm244, %v229, %v243
      %vm246 = vcmask 1047559
      %v247 = vsel %vm246, %v233, %v245
      %vm248 = vcmask 31744
      %v249 = vsel %vm248, %v247, 0
      %v252 = vsel %vm151, %v184, 0
      %254 = vmatprep.subr.mxu0 0.0
      %255 = vmatpush1.msra.mxu0 0.0
      %256 = vmatprep.subr.mxu0 0.0
      %257 = vmatpush1.msra.mxu0 0.0
      %258 = vmatprep.subr.mxu0 0.0
      %259 = vmatpush1.msra.mxu0 0.0
      %260 = vmatprep.subr.mxu0 0.0
      %261 = vmatpush1.msra.mxu0 0.0
      %262 = vmatprep.subr.mxu0 0.0
      %263 = vmatpush1.msra.mxu0 0.0
      %264 = vmatprep.subr.mxu0 0.0
      %265 = vmatpush1.msra.mxu0 0.0
      %266 = vmatprep.subr.mxu0 0.0
      %267 = vmatpush1.msra.mxu0 0.0
      %268 = vmatprep.subr.mxu0 0.0
      %269 = vmatpush1.msra.mxu0 0.0
      %270 = vmatprep.subr.mxu0 0.0
      %271 = vmatpush1.msra.mxu0 0.0
      %272 = vmatprep.subr.mxu0 0.0
      %273 = vmatpush1.msra.mxu0 0.0
      %274 = vmatprep.subr.mxu0 0.0
      %275 = vmatpush1.msra.mxu0 0.0
      %276 = vmatprep.subr.mxu0 0.0
      %277 = vmatpush1.msra.mxu0 0.0
      %278 = vmatprep.subr.mxu0 0.0
      %279 = vmatpush1.msra.mxu0 0.0
      %280 = vmatprep.subr.mxu0 0.0
      %281 = vmatpush1.msra.mxu0 0.0
      %282 = vmatprep.subr.mxu0 0.0
      %283 = vmatpush1.msra.mxu0 0.0
      %284 = vmatprep.subr.mxu0 0.0
      %285 = vmatpush1.msra.mxu0 %v252
      %286 = vmatprep.subr.mxu0 0.0
      %287 = vmatpush2.msra.mxu0 0.0
      %288 = vmatprep.subr.mxu0 0.0
      %289 = vmatpush2.msra.mxu0 0.0
      %290 = vmatprep.subr.mxu0 0.0
      %291 = vmatpush2.msra.mxu0 0.0
      %292 = vmatprep.subr.mxu0 0.0
      %293 = vmatpush2.msra.mxu0 0.0
      %294 = vmatprep.subr.mxu0 0.0
      %295 = vmatpush2.msra.mxu0 0.0
      %296 = vmatprep.subr.mxu0 0.0
      %297 = vmatpush2.msra.mxu0 0.0
      %298 = vmatprep.subr.mxu0 0.0
      %299 = vmatpush2.msra.mxu0 0.0
      %300 = vmatprep.subr.mxu0 0.0
      %301 = vmatpush2.msra.mxu0 0.0
      %302 = vmatprep.subr.mxu0 0.0
      %303 = vmatpush2.msra.mxu0 0.0
      %304 = vmatprep.subr.mxu0 0.0
      %305 = vmatpush2.msra.mxu0 0.0
      %306 = vmatprep.subr.mxu0 0.0
      %307 = vmatpush2.msra.mxu0 0.0
      %308 = vmatprep.subr.mxu0 0.0
      %309 = vmatpush2.msra.mxu0 0.0
      %310 = vmatprep.subr.mxu0 0.0
      %311 = vmatpush2.msra.mxu0 0.0
      %312 = vmatprep.subr.mxu0 0.0
      %313 = vmatpush2.msra.mxu0 0.0
      %314 = vmatprep.subr.mxu0 0.0
      %315 = vmatpush2.msra.mxu0 0.0
      %316 = vmatprep.subr.mxu0 0.0
      %317 = vmatpush2.msra.mxu0 0.0
      %318 = vmatprep.mubr.f32.mxu0 0.0
      %319 = vmatmul.mubr.f32.gmra.mxu0 %v249
      %v320 = vpop.f32.mrf.mxu0
      %v321 = vadd.f32 %v190, %v320
      %v322 = vpop.f32.mrf.mxu0
      %323 = vdwg.mxu0
      %v324 = vmax.f32 %v321, 0.0
      %v325 = vld [vmem:[#allocation8] sm:$0xff]
      %v326 = vld [vmem:[#allocation8 + $0x8] sm:$0xff]
      %v327 = vld [vmem:[#allocation8 + $0x10] sm:$0xff]
      %v328 = vld [vmem:[#allocation8 + $0x18] sm:$0xff]
      %v329 = vld [vmem:[%s4] sm:$0x1]
      %v331 = vlaneseq
      %v332 = vshrl.u32 %v331, 7
      %v333 = vsub.s32 0, %v332
      %v334 = vrot.slane %v329, %v333
      %vm336 = vcmask 261120
      %v338 = vsel %vm336, %v324, 0
      %340 = vmatprep.subr.mxu0 0.0
      %341 = vmatpush1.msra.mxu0 0.0
      %342 = vmatprep.subr.mxu0 0.0
      %343 = vmatpush1.msra.mxu0 0.0
      %344 = vmatprep.subr.mxu0 0.0
      %345 = vmatpush1.msra.mxu0 0.0
      %346 = vmatprep.subr.mxu0 0.0
      %347 = vmatpush1.msra.mxu0 0.0
      %348 = vmatprep.subr.mxu0 0.0
      %349 = vmatpush1.msra.mxu0 0.0
      %350 = vmatprep.subr.mxu0 0.0
      %351 = vmatpush1.msra.mxu0 0.0
      %352 = vmatprep.subr.mxu0 0.0
      %353 = vmatpush1.msra.mxu0 0.0
      %354 = vmatprep.subr.mxu0 0.0
      %355 = vmatpush1.msra.mxu0 0.0
      %356 = vmatprep.subr.mxu0 0.0
      %357 = vmatpush1.msra.mxu0 0.0
      %358 = vmatprep.subr.mxu0 0.0
      %359 = vmatpush1.msra.mxu0 0.0
      %360 = vmatprep.subr.mxu0 0.0
      %361 = vmatpush1.msra.mxu0 0.0
      %362 = vmatprep.subr.mxu0 0.0
      %363 = vmatpush1.msra.mxu0 0.0
      %364 = vmatprep.subr.mxu0 0.0
      %365 = vmatpush1.msra.mxu0 %v328
      %366 = vmatprep.subr.mxu0 0.0
      %367 = vmatpush1.msra.mxu0 %v327
      %368 = vmatprep.subr.mxu0 0.0
      %369 = vmatpush1.msra.mxu0 %v326
      %370 = vmatprep.subr.mxu0 0.0
      %371 = vmatpush1.msra.mxu0 %v325
      %372 = vmatprep.subr.mxu0 0.0
      %373 = vmatpush2.msra.mxu0 0.0
      %374 = vmatprep.subr.mxu0 0.0
      %375 = vmatpush2.msra.mxu0 0.0
      %376 = vmatprep.subr.mxu0 0.0
      %377 = vmatpush2.msra.mxu0 0.0
      %378 = vmatprep.subr.mxu0 0.0
      %379 = vmatpush2.msra.mxu0 0.0
      %380 = vmatprep.subr.mxu0 0.0
      %381 = vmatpush2.msra.mxu0 0.0
      %382 = vmatprep.subr.mxu0 0.0
      %383 = vmatpush2.msra.mxu0 0.0
      %384 = vmatprep.subr.mxu0 0.0
      %385 = vmatpush2.msra.mxu0 0.0
      %386 = vmatprep.subr.mxu0 0.0
      %387 = vmatpush2.msra.mxu0 0.0
      %388 = vmatprep.subr.mxu0 0.0
      %389 = vmatpush2.msra.mxu0 0.0
      %390 = vmatprep.subr.mxu0 0.0
      %391 = vmatpush2.msra.mxu0 0.0
      %392 = vmatprep.subr.mxu0 0.0
      %393 = vmatpush2.msra.mxu0 0.0
      %394 = vmatprep.subr.mxu0 0.0
      %395 = vmatpush2.msra.mxu0 0.0
      %396 = vmatprep.subr.mxu0 0.0
      %397 = vmatpush2.msra.mxu0 0.0
      %398 = vmatprep.subr.mxu0 0.0
      %399 = vmatpush2.msra.mxu0 0.0
      %400 = vmatprep.subr.mxu0 0.0
      %401 = vmatpush2.msra.mxu0 0.0
      %402 = vmatprep.subr.mxu0 0.0
      %403 = vmatpush2.msra.mxu0 0.0
      %404 = vmatprep.mubr.f32.mxu0 0.0
      %405 = vmatmul.mubr.f32.gmra.mxu0 %v338
      %v406 = vpop.f32.mrf.mxu0
      %v407 = vadd.f32 %v334, %v406
      %v408 = vpop.f32.mrf.mxu0
      %409 = vdwg.mxu0
      %v410 = vmax.f32 %v407, 0.0
      %v411 = vld [vmem:[#allocation9] sm:$0xff]
      %v412 = vld [vmem:[#allocation9 + $0x8] sm:$0xff]
      %v413 = vld [vmem:[#allocation9 + $0x10] sm:$0xff]
      %v414 = vld [vmem:[#allocation9 + $0x18] sm:$0xff]
      %v415 = vld [vmem:[%s6] sm:$0x1]
      %v417 = vlaneseq
      %v418 = vshrl.u32 %v417, 7
      %v419 = vsub.s32 0, %v418
      %v420 = vrot.slane %v415, %v419
      %v423 = vsel %vm336, %v410, 0
      %425 = vmatprep.subr.mxu0 0.0
      %426 = vmatpush1.msra.mxu0 0.0
      %427 = vmatprep.subr.mxu0 0.0
      %428 = vmatpush1.msra.mxu0 0.0
      %429 = vmatprep.subr.mxu0 0.0
      %430 = vmatpush1.msra.mxu0 0.0
      %431 = vmatprep.subr.mxu0 0.0
      %432 = vmatpush1.msra.mxu0 0.0
      %433 = vmatprep.subr.mxu0 0.0
      %434 = vmatpush1.msra.mxu0 0.0
      %435 = vmatprep.subr.mxu0 0.0
      %436 = vmatpush1.msra.mxu0 0.0
      %437 = vmatprep.subr.mxu0 0.0
      %438 = vmatpush1.msra.mxu0 0.0
      %439 = vmatprep.subr.mxu0 0.0
      %440 = vmatpush1.msra.mxu0 0.0
      %441 = vmatprep.subr.mxu0 0.0
      %442 = vmatpush1.msra.mxu0 0.0
      %443 = vmatprep.subr.mxu0 0.0
      %444 = vmatpush1.msra.mxu0 0.0
      %445 = vmatprep.subr.mxu0 0.0
      %446 = vmatpush1.msra.mxu0 0.0
      %447 = vmatprep.subr.mxu0 0.0
      %448 = vmatpush1.msra.mxu0 0.0
      %449 = vmatprep.subr.mxu0 0.0
      %450 = vmatpush1.msra.mxu0 %v414
      %451 = vmatprep.subr.mxu0 0.0
      %452 = vmatpush1.msra.mxu0 %v413
      %453 = vmatprep.subr.mxu0 0.0
      %454 = vmatpush1.msra.mxu0 %v412
      %455 = vmatprep.subr.mxu0 0.0
      %456 = vmatpush1.msra.mxu0 %v411
      %457 = vmatprep.subr.mxu0 0.0
      %458 = vmatpush2.msra.mxu0 0.0
      %459 = vmatprep.subr.mxu0 0.0
      %460 = vmatpush2.msra.mxu0 0.0
      %461 = vmatprep.subr.mxu0 0.0
      %462 = vmatpush2.msra.mxu0 0.0
      %463 = vmatprep.subr.mxu0 0.0
      %464 = vmatpush2.msra.mxu0 0.0
      %465 = vmatprep.subr.mxu0 0.0
      %466 = vmatpush2.msra.mxu0 0.0
      %467 = vmatprep.subr.mxu0 0.0
      %468 = vmatpush2.msra.mxu0 0.0
      %469 = vmatprep.subr.mxu0 0.0
      %470 = vmatpush2.msra.mxu0 0.0
      %471 = vmatprep.subr.mxu0 0.0
      %472 = vmatpush2.msra.mxu0 0.0
      %473 = vmatprep.subr.mxu0 0.0
      %474 = vmatpush2.msra.mxu0 0.0
      %475 = vmatprep.subr.mxu0 0.0
      %476 = vmatpush2.msra.mxu0 0.0
      %477 = vmatprep.subr.mxu0 0.0
      %478 = vmatpush2.msra.mxu0 0.0
      %479 = vmatprep.subr.mxu0 0.0
      %480 = vmatpush2.msra.mxu0 0.0
      %481 = vmatprep.subr.mxu0 0.0
      %482 = vmatpush2.msra.mxu0 0.0
      %483 = vmatprep.subr.mxu0 0.0
      %484 = vmatpush2.msra.mxu0 0.0
      %485 = vmatprep.subr.mxu0 0.0
      %486 = vmatpush2.msra.mxu0 0.0
      %487 = vmatprep.subr.mxu0 0.0
      %488 = vmatpush2.msra.mxu0 0.0
      %489 = vmatprep.mubr.f32.mxu0 0.0
      %490 = vmatmul.mubr.f32.gmra.mxu0 %v423
      %v491 = vpop.f32.mrf.mxu0
      %v492 = vadd.f32 %v420, %v491
      %v493 = vpop.f32.mrf.mxu0
      %494 = vdwg.mxu0
      %495 = vst [vmem:[#allocation11] sm:$0xff] %v492
    $region53: #{tpu_custom_call.1} parent=1 // pred_fallthru
      _
    // Predicated region
    $region54: #{tpu_custom_call.1} parent=1 // pred_check
      _
    $region55: #{tpu_custom_call.1} parent=1 // pred_check_branch
      %497 = sbr.rel (0) target = $region57
    $region56: #{tpu_custom_call.1} parent=1 // pred_region
      %s499 = ssub.s32 128, 128
      %500 = vsyncadd [#allocation5], %s499
      %s502 = sshll.u32 [#allocation11], 4
      %s503 = int_to_ptr.vmem [resolvable:$true] %s502
      %505 = dma.vmem_to_hbm [thread:$0]  %s503, 128, %s7, [#allocation5]
    $region57: #{tpu_custom_call.1} parent=1 // pred_fallthru
      _
    // Predicated region
    $region58: #{tpu_custom_call.1} parent=1 // pred_check
      _
    $region59: #{tpu_custom_call.1} parent=1 // pred_check_branch
      %507 = sbr.rel (0) target = $region61
    $region60: #{tpu_custom_call.1} parent=1 // pred_region
      %508 = dma.done [#allocation5], 128
    $region61: #{tpu_custom_call.1} parent=1 // pred_fallthru
      _
    %509 = vsyncpa [#allocation4], 1
    %510 = vsyncpa [#allocation7], 1
    %511 = vsyncpa [#allocation10], 1
    %512 = vsyncpa [#allocation5], 1

</llo_original>
